<compile_context>
chip_gen: v7x
topology: tpu7x:2x2x1
jax: 0.10.0
libtpu: 0.0.40
codegen_flags: <defaults>
</compile_context>

<pallas_src>
import functools
import math

import jax
import jax.numpy as jnp
from jax.experimental import pallas as pl
from jax.experimental.pallas import tpu as pltpu


# ----------------------------------------------------------------------------
# tile-size helpers
# ----------------------------------------------------------------------------

def _tile_rows(m, target=256):
    """Largest power-of-two (>=8) divisor of m up to target, else full m."""
    c = target
    while c >= 8:
        if c <= m and m % c == 0:
            return c
        c //= 2
    return m


def _tile_lanes(n, target=512):
    """Largest multiple-of-128 power-of-two divisor of n up to target, else full n."""
    c = target
    while c >= 128:
        if c <= n and n % c == 0:
            return c
        c //= 2
    return n


def _pick_batch_tile(nb, target=8):
    """Batch tile for the grouping kernel; prefer a grid of >=2 steps (megacore)."""
    for c in (target, 4, 2):
        if nb % c == 0 and nb // c >= 2:
            return c
    return nb


_VMEM_LIMIT = 64 * 1024 * 1024  # explicit scoped-VMEM cap, safe on v5e/v6e/v7x


# ----------------------------------------------------------------------------
# Pallas kernels
# ----------------------------------------------------------------------------

def _linear_kernel(x_ref, w_ref, b_ref, o_ref, acc_ref):
    # y = x @ W + b, K-tiled with an f32 accumulator; x/W arrive as bf16.
    @pl.when(pl.program_id(2) == 0)
    def _():
        acc_ref[...] = jnp.zeros_like(acc_ref)

    acc_ref[...] += jnp.dot(x_ref[...], w_ref[...],
                            preferred_element_type=jnp.float32)

    @pl.when(pl.program_id(2) == pl.num_programs(2) - 1)
    def _():
        o_ref[...] = acc_ref[...] + b_ref[...]


def _bn_gelu_linear_kernel(x_ref, sc_ref, sh_ref, w_ref, b_ref, o_ref, acc_ref):
    # y = GELU(x * scale + shift) @ W + b  (BN-apply + GELU fused into matmul prologue).
    # Elementwise math stays in f32 (v5e has no bf16 VPU/EUP); only the MXU sees bf16.
    @pl.when(pl.program_id(2) == 0)
    def _():
        acc_ref[...] = jnp.zeros_like(acc_ref)

    y = x_ref[...] * sc_ref[...] + sh_ref[...]
    h = 0.5 * y * (1.0 + jax.lax.erf(y * 0.7071067811865476))
    acc_ref[...] += jnp.dot(h.astype(jnp.bfloat16), w_ref[...],
                            preferred_element_type=jnp.float32)

    @pl.when(pl.program_id(2) == pl.num_programs(2) - 1)
    def _():
        o_ref[...] = acc_ref[...] + b_ref[...]


def _bn_stats_kernel(x_ref, m_ref, s_ref, q_ref, acc_s, acc_q):
    # Tiled column-wise sum / sum-of-squares (optionally row-masked) for BatchNorm stats.
    i = pl.program_id(1)  # reduction over rows, last grid axis

    @pl.when(i == 0)
    def _():
        acc_s[...] = jnp.zeros_like(acc_s)
        acc_q[...] = jnp.zeros_like(acc_q)

    x = x_ref[...]
    xm = x * m_ref[...]
    acc_s[...] += jnp.sum(xm, axis=0, keepdims=True)
    acc_q[...] += jnp.sum(xm * x, axis=0, keepdims=True)

    @pl.when(i == pl.num_programs(1) - 1)
    def _():
        s_ref[...] = acc_s[...]
        q_ref[...] = acc_q[...]


def _grouping_kernel(x_ref, snT_ref, dots_ref, slots_ref, *, temp, eps, tb, hw):
    # SemanticGrouping.forward for TB images per grid step.
    x = x_ref[...]                                           # (TB*HW, D) raw features (x_prev)
    snT = snT_ref[...].astype(jnp.bfloat16)                  # (D, K) L2-normalized prototypes (pre-transposed)
    inv = jax.lax.rsqrt(jnp.maximum(jnp.sum(x * x, axis=-1, keepdims=True), 1e-24))
    xn = (x * inv).astype(jnp.bfloat16)                      # F.normalize(x, dim=channel)
    dots = jnp.dot(xn, snT, preferred_element_type=jnp.float32)   # (TB*HW, K)
    dots_ref[...] = dots

    logits = dots * (1.0 / temp)
    logits = logits - jnp.max(logits, axis=-1, keepdims=True)
    e = jnp.exp(logits)
    attn = e * pl.reciprocal(jnp.sum(e, axis=-1, keepdims=True), approx=True) + eps

    xb = x.astype(jnp.bfloat16)
    for bi in range(tb):
        sl = slice(bi * hw, (bi + 1) * hw)
        a_b = attn[sl]                                       # (HW, K)
        w_b = a_b * pl.reciprocal(jnp.sum(a_b, axis=0, keepdims=True), approx=True)
        # slots[k, d] = sum_hw w[hw, k] * x[hw, d]   (no explicit transpose)
        slots_ref[bi] = jax.lax.dot_general(
            w_b.astype(jnp.bfloat16), xb[sl],
            (((0,), (0,)), ((), ())), preferred_element_type=jnp.float32)


def _self_distill_kernel(q_ref, k_ref, c_ref, o_ref, acc_ref, *, st, tt, inv_n):
    # mean_n sum_k[ -softmax((k - center)/Tt) * log_softmax(q/Ts) ], row-tiled.
    i = pl.program_id(0)

    @pl.when(i == 0)
    def _():
        acc_ref[...] = jnp.zeros_like(acc_ref)

    q = q_ref[...] * (1.0 / st)
    q = q - jnp.max(q, axis=-1, keepdims=True)
    logp = q - jnp.log(jnp.sum(jnp.exp(q), axis=-1, keepdims=True))
    t = (k_ref[...] - c_ref[...]) * (1.0 / tt)
    t = t - jnp.max(t, axis=-1, keepdims=True)
    e = jnp.exp(t)
    p = e * pl.reciprocal(jnp.sum(e, axis=-1, keepdims=True), approx=True)
    row = jnp.sum(-p * logp, axis=-1, keepdims=True)          # (tm, 1)
    acc_ref[...] += jnp.sum(row, axis=0, keepdims=True)       # (1, 1)

    @pl.when(i == pl.num_programs(0) - 1)
    def _():
        o_ref[...] = acc_ref[...] * inv_n


# ----------------------------------------------------------------------------
# Pallas wrappers
# ----------------------------------------------------------------------------

def pallas_linear(x, w, b):
    m, kd = x.shape
    n = w.shape[1]
    tm, tn, tk = _tile_rows(m), _tile_lanes(n), _tile_lanes(kd)
    return pl.pallas_call(
        _linear_kernel,
        out_shape=jax.ShapeDtypeStruct((m, n), jnp.float32),
        grid=(m // tm, n // tn, kd // tk),
        in_specs=[pl.BlockSpec((tm, tk), lambda i, j, kk: (i, kk)),
                  pl.BlockSpec((tk, tn), lambda i, j, kk: (kk, j)),
                  pl.BlockSpec((1, tn), lambda i, j, kk: (0, j))],
        out_specs=pl.BlockSpec((tm, tn), lambda i, j, kk: (i, j)),
        scratch_shapes=[pltpu.VMEM((tm, tn), jnp.float32)],
        compiler_params=pltpu.CompilerParams(
            dimension_semantics=("parallel", "parallel", "arbitrary"),
            vmem_limit_bytes=_VMEM_LIMIT),
    )(x.astype(jnp.bfloat16), w.astype(jnp.bfloat16),
      b.reshape(1, n).astype(jnp.float32))


def pallas_bn_gelu_linear(x, scale, shift, w, b):
    m, kd = x.shape
    n = w.shape[1]
    tm, tn, tk = _tile_rows(m), _tile_lanes(n), _tile_lanes(kd)
    return pl.pallas_call(
        _bn_gelu_linear_kernel,
        out_shape=jax.ShapeDtypeStruct((m, n), jnp.float32),
        grid=(m // tm, n // tn, kd // tk),
        in_specs=[pl.BlockSpec((tm, tk), lambda i, j, kk: (i, kk)),
                  pl.BlockSpec((1, tk), lambda i, j, kk: (0, kk)),
                  pl.BlockSpec((1, tk), lambda i, j, kk: (0, kk)),
                  pl.BlockSpec((tk, tn), lambda i, j, kk: (kk, j)),
                  pl.BlockSpec((1, tn), lambda i, j, kk: (0, j))],
        out_specs=pl.BlockSpec((tm, tn), lambda i, j, kk: (i, j)),
        scratch_shapes=[pltpu.VMEM((tm, tn), jnp.float32)],
        compiler_params=pltpu.CompilerParams(
            dimension_semantics=("parallel", "parallel", "arbitrary"),
            vmem_limit_bytes=_VMEM_LIMIT),
    )(x.astype(jnp.float32),
      scale.reshape(1, kd).astype(jnp.float32),
      shift.reshape(1, kd).astype(jnp.float32),
      w.astype(jnp.bfloat16),
      b.reshape(1, n).astype(jnp.float32))


def pallas_bn_stats(x, row_mask=None):
    """Column-wise sum and sum-of-squares over (optionally masked) rows."""
    m, n = x.shape
    tm = _tile_rows(m, target=512)
    tn = _tile_lanes(n)
    if row_mask is None:
        row_mask = jnp.ones((m, 1), jnp.float32)
    else:
        row_mask = row_mask.reshape(m, 1).astype(jnp.float32)
    s, q = pl.pallas_call(
        _bn_stats_kernel,
        out_shape=(jax.ShapeDtypeStruct((1, n), jnp.float32),
                   jax.ShapeDtypeStruct((1, n), jnp.float32)),
        grid=(n // tn, m // tm),
        in_specs=[pl.BlockSpec((tm, tn), lambda j, i: (i, j)),
                  pl.BlockSpec((tm, 1), lambda j, i: (i, 0))],
        out_specs=(pl.BlockSpec((1, tn), lambda j, i: (0, j)),
                   pl.BlockSpec((1, tn), lambda j, i: (0, j))),
        scratch_shapes=[pltpu.VMEM((1, tn), jnp.float32),
                        pltpu.VMEM((1, tn), jnp.float32)],
        compiler_params=pltpu.CompilerParams(
            dimension_semantics=("parallel", "arbitrary")),
    )(x.astype(jnp.float32), row_mask)
    return s, q


def pallas_grouping(x_feat, slot_embed, temp, eps=1e-6):
    """x_feat: (NB, HW, D) projector output; slot_embed: (K, D). Returns (slots, dots)."""
    nb, hw, d = x_feat.shape
    k = slot_embed.shape[0]
    inv = jax.lax.rsqrt(jnp.maximum(
        jnp.sum(slot_embed * slot_embed, axis=1, keepdims=True), 1e-24))
    snT = jnp.transpose(slot_embed * inv)                     # (D, K), transposed in the wrapper
    tb = _pick_batch_tile(nb)
    x_rows = x_feat.reshape(nb * hw, d)
    dots_rows, slots = pl.pallas_call(
        functools.partial(_grouping_kernel, temp=float(temp), eps=float(eps),
                          tb=tb, hw=hw),
        out_shape=(jax.ShapeDtypeStruct((nb * hw, k), jnp.float32),
                   jax.ShapeDtypeStruct((nb, k, d), jnp.float32)),
        grid=(nb // tb,),
        in_specs=[pl.BlockSpec((tb * hw, d), lambda i: (i, 0)),
                  pl.BlockSpec((d, k), lambda i: (0, 0))],
        out_specs=(pl.BlockSpec((tb * hw, k), lambda i: (i, 0)),
                   pl.BlockSpec((tb, k, d), lambda i: (i, 0, 0))),
        compiler_params=pltpu.CompilerParams(
            dimension_semantics=("parallel",)),
    )(x_rows, snT)
    return slots, dots_rows.reshape(nb, hw, k)


def pallas_self_distill(q, k, center, student_temp, teacher_temp):
    n, kk = q.shape
    tm = _tile_rows(n, target=512)
    out = pl.pallas_call(
        functools.partial(_self_distill_kernel, st=float(student_temp),
                          tt=float(teacher_temp), inv_n=1.0 / n),
        out_shape=jax.ShapeDtypeStruct((1, 1), jnp.float32),
        grid=(n // tm,),
        in_specs=[pl.BlockSpec((tm, kk), lambda i: (i, 0)),
                  pl.BlockSpec((tm, kk), lambda i: (i, 0)),
                  pl.BlockSpec((1, kk), lambda i: (0, 0))],
        out_specs=pl.BlockSpec((1, 1), lambda i: (0, 0)),
        scratch_shapes=[pltpu.VMEM((1, 1), jnp.float32)],
        compiler_params=pltpu.CompilerParams(
            dimension_semantics=("arbitrary",)),
    )(q, k, center)
    return out[0, 0]


# ----------------------------------------------------------------------------
# DINOHead / DINOHead2d: Linear -> BN -> GELU -> Linear -> BN -> GELU -> Linear
# (1x1 conv == per-row linear; BN-apply + GELU fused into the next matmul)
# ----------------------------------------------------------------------------

def dino_head_forward(x_rows, p, row_mask=None, bn_eps=1e-5):
    m = x_rows.shape[0]
    if row_mask is None:
        count = jnp.float32(m)
    else:
        count = jnp.maximum(jnp.sum(row_mask), 1.0)

    def bn_scale_shift(h, gamma, beta):
        s, sq = pallas_bn_stats(h, row_mask)       # training-mode (biased) batch stats
        mean = s / count
        var = jnp.maximum(sq / count - mean * mean, 0.0)
        scale = gamma * jax.lax.rsqrt(var + bn_eps)
        shift = beta - mean * scale
        return scale, shift

    h = pallas_linear(x_rows, p["w0"], p["b0"])
    sc, sh = bn_scale_shift(h, p["g0"], p["be0"])
    h = pallas_bn_gelu_linear(h, sc, sh, p["w1"], p["b1"])
    sc, sh = bn_scale_shift(h, p["g1"], p["be1"])
    return pallas_bn_gelu_linear(h, sc, sh, p["w2"], p["b2"])


def make_head_params(key, in_dim, hidden, out_dim):
    ks = jax.random.split(key, 3)

    def tn(k, shape):  # trunc_normal_(std=0.02)
        return jax.random.truncated_normal(k, -2.0, 2.0, shape, jnp.float32) * 0.02

    return dict(
        w0=tn(ks[0], (in_dim, hidden)), b0=jnp.zeros((hidden,), jnp.float32),
        g0=jnp.ones((1, hidden), jnp.float32), be0=jnp.zeros((1, hidden), jnp.float32),
        w1=tn(ks[1], (hidden, hidden)), b1=jnp.zeros((hidden,), jnp.float32),
        g1=jnp.ones((1, hidden), jnp.float32), be1=jnp.zeros((1, hidden), jnp.float32),
        w2=tn(ks[2], (hidden, out_dim)), b2=jnp.zeros((out_dim,), jnp.float32),
    )


# ----------------------------------------------------------------------------
# invaug glue: roi_align(aligned=True, 1 sample/bin) + per-sample horizontal flip,
# on channels-last score maps (B, H, W, K) -- no NCHW round trip.
# ----------------------------------------------------------------------------

def _roi_align_single(feat, box, out_h, out_w):
    h, w, c = feat.shape
    x1, y1, x2, y2 = box[0], box[1], box[2], box[3]
    bin_w = (x2 - x1) / out_w
    bin_h = (y2 - y1) / out_h
    xs = (x1 - 0.5) + (jnp.arange(out_w, dtype=jnp.float32) + 0.5) * bin_w
    ys = (y1 - 0.5) + (jnp.arange(out_h, dtype=jnp.float32) + 0.5) * bin_h
    yy = jnp.broadcast_to(ys[:, None], (out_h, out_w))
    xx = jnp.broadcast_to(xs[None, :], (out_h, out_w))
    valid = (yy >= -1.0) & (yy <= h) & (xx >= -1.0) & (xx <= w)
    y = jnp.clip(yy, 0.0)
    x = jnp.clip(xx, 0.0)
    y_low = jnp.minimum(jnp.floor(y).astype(jnp.int32), h - 1)
    x_low = jnp.minimum(jnp.floor(x).astype(jnp.int32), w - 1)
    y_high = jnp.minimum(y_low + 1, h - 1)
    x_high = jnp.minimum(x_low + 1, w - 1)
    y = jnp.where(y_low >= h - 1, jnp.float32(h - 1), y)
    x = jnp.where(x_low >= w - 1, jnp.float32(w - 1), x)
    ly = y - y_low.astype(jnp.float32)
    lx = x - x_low.astype(jnp.float32)
    hy, hx = 1.0 - ly, 1.0 - lx
    v1 = feat[y_low, x_low]
    v2 = feat[y_low, x_high]
    v3 = feat[y_high, x_low]
    v4 = feat[y_high, x_high]
    out = ((hy * hx)[..., None] * v1 + (hy * lx)[..., None] * v2
           + (ly * hx)[..., None] * v3 + (ly * lx)[..., None] * v4)
    return jnp.where(valid[..., None], out, 0.0)


def invaug(x_bhwc, coords, flags):
    n, h, w, c = x_bhwc.shape
    boxes = coords * jnp.array([w, h, w, h], dtype=jnp.float32)
    aligned = jax.vmap(lambda f, b: _roi_align_single(f, b, h, w))(x_bhwc, boxes)
    return jnp.where(flags[:, None, None, None], jnp.flip(aligned, axis=2), aligned)


# ----------------------------------------------------------------------------
# ctr_loss_filtered: static-shape masked InfoNCE (jit-friendly, identical semantics)
# ----------------------------------------------------------------------------

def ctr_loss_filtered(q, k, score_q, score_k, pred_params, tau=0.2):
    b, kk, d = q.shape
    qf = q.reshape(b * kk, d)
    kf = k.reshape(b * kk, d)
    kn = kf / jnp.maximum(jnp.sqrt(jnp.sum(kf * kf, axis=1, keepdims=True)), 1e-12)

    def occupancy(score):  # score: (B, HW, K) -> (B, K) in {0., 1.}
        am = jnp.argmax(score, axis=-1)                       # (B, HW)
        onehot = jax.nn.one_hot(am, kk, dtype=jnp.float32)    # (B, HW, K)
        return (jnp.sum(onehot, axis=1) > 0).astype(jnp.float32)

    mask_q = occupancy(score_q).reshape(-1)                   # (B*K,)
    mask_k = occupancy(score_k).reshape(-1)                   # (B*K,)
    mask_inter = mask_q * mask_k                              # valid q rows (and own target col)
    n_sel = jnp.maximum(jnp.sum(mask_inter), 1.0)

    # predictor_slot (DINOHead): BN stats restricted to the selected rows via mask weighting
    pred = dino_head_forward(qf, pred_params, row_mask=mask_inter)
    pred_n = pred / jnp.maximum(jnp.sqrt(jnp.sum(pred * pred, axis=1, keepdims=True)), 1e-12)

    zero_bias = jnp.zeros((b * kk,), jnp.float32)
    logits = pallas_linear(pred_n, jnp.transpose(kn), zero_bias) * (1.0 / tau)  # (BK, BK)

    # rank == 0, world_size == 1: label of row i is its own (compacted) column -> diagonal
    logits = jnp.where(mask_k[None, :] > 0, logits, jnp.float32(-1e30))
    lse = jax.nn.logsumexp(logits, axis=-1)
    diag = jnp.diagonal(logits)
    per_row = lse - diag                                      # -log softmax at the label
    ce = jnp.sum(per_row * mask_inter) / n_sel
    return ce * (2.0 * tau)


# ----------------------------------------------------------------------------
# SlotCon forward
# ----------------------------------------------------------------------------

def slotcon_forward(params, crops, coords, flags, cfg):
    b, c, h, w = crops[0].shape
    hw = h * w
    d = cfg["dim_out"]
    kproto = cfg["num_prototypes"]

    def to_rows(x_nchw):  # backbone NCHW feature map -> channels-last rows (B*HW, C)
        return jnp.transpose(x_nchw, (0, 2, 3, 1)).reshape(b * hw, -1)

    rows1, rows2 = to_rows(crops[0]), to_rows(crops[1])

    # student projector
    x1 = dino_head_forward(rows1, params["proj_q"])
    x2 = dino_head_forward(rows2, params["proj_q"])

    # momentum update of key branch (pure/functional; params start equal -> numerically a no-op)
    m_mom = 1.0 - (1.0 - cfg["teacher_momentum"]) * (
        math.cos(math.pi * cfg["k"] / cfg["K"]) + 1.0) * 0.5
    ema = lambda pk, pq: pk * m_mom + pq * (1.0 - m_mom)
    proj_k = jax.tree_util.tree_map(ema, params["proj_k"], params["proj_q"])
    slots_k_embed = ema(params["slots_k"], params["slots_q"])

    y1 = dino_head_forward(rows1, proj_k)
    y2 = dino_head_forward(rows2, proj_k)

    tt, st = cfg["teacher_temp"], cfg["student_temp"]

    # both crops of a branch share one grouping pallas_call (batched grid over 2B)
    xq = jnp.concatenate([x1.reshape(b, hw, d), x2.reshape(b, hw, d)], axis=0)
    yk = jnp.concatenate([y1.reshape(b, hw, d), y2.reshape(b, hw, d)], axis=0)
    slots_qb, score_qb = pallas_grouping(xq, params["slots_q"], tt)
    slots_kb, score_kb = pallas_grouping(yk, slots_k_embed, tt)
    q1, q2 = slots_qb[:b], slots_qb[b:]
    k1, k2 = slots_kb[:b], slots_kb[b:]
    score_q1, score_q2 = score_qb[:b], score_qb[b:]
    score_k1, score_k2 = score_kb[:b], score_kb[b:]

    def to_maps(score):   # (B, HW, K) -> (B, H, W, K)   (stays channels-last)
        return score.reshape(b, h, w, kproto)

    def to_rows_k(maps):  # (B, H, W, K) -> (B*HW, K)
        return maps.reshape(b * hw, kproto)

    q1_al = invaug(to_maps(score_q1), coords[0], flags[0])
    q2_al = invaug(to_maps(score_q2), coords[1], flags[1])
    k1_al = invaug(to_maps(score_k1), coords[0], flags[0])
    k2_al = invaug(to_maps(score_k2), coords[1], flags[1])

    glw = cfg["group_loss_weight"]
    center = params["center"]
    loss = glw * pallas_self_distill(to_rows_k(q1_al), to_rows_k(k2_al), center, st, tt)
    loss = loss + glw * pallas_self_distill(to_rows_k(q2_al), to_rows_k(k1_al), center, st, tt)

    # update_center (single device: dist.all_reduce identity, world_size == 1)
    teacher_rows = score_kb.reshape(2 * b * hw, kproto)
    col_sum, _ = pallas_bn_stats(teacher_rows)
    batch_center = col_sum / (2.0 * b * hw)
    new_center = center * cfg["center_momentum"] + batch_center * (1.0 - cfg["center_momentum"])

    loss = loss + (1.0 - glw) * ctr_loss_filtered(q1, k2, score_q1, score_k2, params["pred"])
    loss = loss + (1.0 - glw) * ctr_loss_filtered(q2, k1, score_q2, score_k1, params["pred"])

    new_state = dict(proj_k=proj_k, slots_k=slots_k_embed, center=new_center)
    return loss, new_state


# ----------------------------------------------------------------------------
# main
# ----------------------------------------------------------------------------

if __name__ == "__main__":
    B, C, H, W = 2, 16, 8, 8     # C = backbone feature channels (synthetic, small)
    cfg = dict(dim_hidden=32, dim_out=16, num_prototypes=8,
               group_loss_weight=0.5, student_temp=0.1, teacher_temp=0.07,
               teacher_momentum=0.99, center_momentum=0.9, k=0, K=500)

    key = jax.random.PRNGKey(0)
    kp, kpred, kslot, kx1, kx2 = jax.random.split(key, 5)

    params = dict(
        proj_q=make_head_params(kp, C, cfg["dim_hidden"], cfg["dim_out"]),
        pred=make_head_params(kpred, cfg["dim_out"], cfg["dim_hidden"], cfg["dim_out"]),
        slots_q=jax.random.normal(kslot, (cfg["num_prototypes"], cfg["dim_out"]), jnp.float32),
        center=jnp.zeros((1, cfg["num_prototypes"]), jnp.float32),
    )
    # key branch initialized as a copy of the query branch (as in the reference)
    params["proj_k"] = jax.tree_util.tree_map(lambda a: a + 0.0, params["proj_q"])
    params["slots_k"] = params["slots_q"] + 0.0

    crops = [jax.random.normal(kx1, (B, C, H, W), jnp.float32),
             jax.random.normal(kx2, (B, C, H, W), jnp.float32)]
    coords = [jnp.array([[0.00, 0.00, 1.00, 1.00],
                         [0.10, 0.05, 0.90, 0.95]], jnp.float32),
              jnp.array([[0.05, 0.10, 0.95, 0.90],
                         [0.00, 0.00, 1.00, 1.00]], jnp.float32)]
    flags = [jnp.array([False, True]), jnp.array([True, False])]

    loss, new_state = slotcon_forward(params, crops, coords, flags, cfg)
    loss = jax.block_until_ready(loss)
    jax.block_until_ready(new_state["center"])
    assert bool(jnp.isfinite(loss)), "loss is not finite"
    print("KERNEL_OK")
</pallas_src>

<mosaic_0001>
module attributes {stable_mosaic.version = 11 : i64} {
  func.func @_linear_kernel(%arg0: i32, %arg1: i32, %arg2: i32, %arg3: memref<128x16xbf16, #tpu.memory_space<vmem>>, %arg4: memref<16x32xbf16, #tpu.memory_space<vmem>>, %arg5: memref<1x32xf32, #tpu.memory_space<vmem>>, %arg6: memref<128x32xf32, #tpu.memory_space<vmem>>, %arg7: memref<128x32xf32, #tpu.memory_space<vmem>>) attributes {dimension_semantics = [#tpu.dimension_semantics<parallel>, #tpu.dimension_semantics<parallel>, #tpu.dimension_semantics<arbitrary>], iteration_bounds = array<i64: 1, 1, 1>, scalar_prefetch = 0 : i64, scratch_operands = 1 : i64, tpu.core_type = #tpu.core_type<tc>, window_params = [{transform_indices = @transform_0, window_bounds = array<i64: 128, 16>}, {transform_indices = @transform_1, window_bounds = array<i64: 16, 32>}, {transform_indices = @transform_2, window_bounds = array<i64: 1, 32>}, {transform_indices = @transform_3, window_bounds = array<i64: 128, 32>}]} {
    %c0_i32 = arith.constant 0 : i32
    %0 = arith.cmpi eq, %arg2, %c0_i32 : i32
    %1 = arith.extui %0 : i1 to i32
    %c0_i32_0 = arith.constant 0 : i32
    %2 = arith.cmpi ne, %1, %c0_i32_0 : i32
    scf.if %2 {
      %cst_10 = arith.constant 0.000000e+00 : f32
      %12 = vector.broadcast %cst_10 : f32 to vector<128x32xf32>
      %c0_11 = arith.constant 0 : index
      %c0_12 = arith.constant 0 : index
      %13 = vector.load %arg7[%c0_11, %c0_12] : memref<128x32xf32, #tpu.memory_space<vmem>>, vector<128x32xf32>
      tpu.vector_store %arg7[%c0_11, %c0_12], %12 {strides = array<i32>} : memref<128x32xf32, #tpu.memory_space<vmem>>, vector<128x32xf32>,
    } else {
    }
    %c0 = arith.constant 0 : index
    %c0_1 = arith.constant 0 : index
    %3 = vector.load %arg7[%c0, %c0_1] : memref<128x32xf32, #tpu.memory_space<vmem>>, vector<128x32xf32>
    %c0_2 = arith.constant 0 : index
    %c0_3 = arith.constant 0 : index
    %4 = vector.load %arg3[%c0_2, %c0_3] : memref<128x16xbf16, #tpu.memory_space<vmem>>, vector<128x16xbf16>
    %c0_4 = arith.constant 0 : index
    %c0_5 = arith.constant 0 : index
    %5 = vector.load %arg4[%c0_4, %c0_5] : memref<16x32xbf16, #tpu.memory_space<vmem>>, vector<16x32xbf16>
    %cst = arith.constant dense<0.000000e+00> : vector<128x32xf32>
    %6 = tpu.matmul %4, %5, %cst {dimension_numbers = #tpu.dot_dimension_numbers<[1], [0], [0], [1], [0, 0, 1, 1], [], []>} : vector<128x16xbf16>, vector<16x32xbf16>, vector<128x32xf32> -> vector<128x32xf32>
    %7 = arith.addf %3, %6 : vector<128x32xf32>
    %c0_6 = arith.constant 0 : index
    %c0_7 = arith.constant 0 : index
    %8 = vector.load %arg7[%c0_6, %c0_7] : memref<128x32xf32, #tpu.memory_space<vmem>>, vector<128x32xf32>
    tpu.vector_store %arg7[%c0_6, %c0_7], %7 {strides = array<i32>} : memref<128x32xf32, #tpu.memory_space<vmem>>, vector<128x32xf32>,
    %c0_i32_8 = arith.constant 0 : i32
    %9 = arith.cmpi eq, %arg2, %c0_i32_8 : i32
    %10 = arith.extui %9 : i1 to i32
    %c0_i32_9 = arith.constant 0 : i32
    %11 = arith.cmpi ne, %10, %c0_i32_9 : i32
    scf.if %11 {
      %c0_10 = arith.constant 0 : index
      %c0_11 = arith.constant 0 : index
      %12 = vector.load %arg7[%c0_10, %c0_11] : memref<128x32xf32, #tpu.memory_space<vmem>>, vector<128x32xf32>
      %c0_12 = arith.constant 0 : index
      %c0_13 = arith.constant 0 : index
      %13 = vector.load %arg5[%c0_12, %c0_13] : memref<1x32xf32, #tpu.memory_space<vmem>>, vector<1x32xf32>
      %14 = vector.broadcast %13 : vector<1x32xf32> to vector<128x32xf32>
      %15 = arith.addf %12, %14 : vector<128x32xf32>
      %c0_14 = arith.constant 0 : index
      %c0_15 = arith.constant 0 : index
      %16 = vector.load %arg6[%c0_14, %c0_15] : memref<128x32xf32, #tpu.memory_space<vmem>>, vector<128x32xf32>
      tpu.vector_store %arg6[%c0_14, %c0_15], %15 {strides = array<i32>} : memref<128x32xf32, #tpu.memory_space<vmem>>, vector<128x32xf32>,
    } else {
    }
    return
  }
  func.func @transform_0(%arg0: i32, %arg1: i32, %arg2: i32) -> (i32, i32) {
    %c0_i32 = arith.constant 0 : i32
    return %arg0, %arg2 : i32, i32
  }
  func.func @transform_1(%arg0: i32, %arg1: i32, %arg2: i32) -> (i32, i32) {
    %c0_i32 = arith.constant 0 : i32
    return %arg2, %arg1 : i32, i32
  }
  func.func @transform_2(%arg0: i32, %arg1: i32, %arg2: i32) -> (i32, i32) {
    %c0_i32 = arith.constant 0 : i32
    %c0_i32_0 = arith.constant 0 : i32
    return %c0_i32, %arg1 : i32, i32
  }
  func.func @transform_3(%arg0: i32, %arg1: i32, %arg2: i32) -> (i32, i32) {
    %c0_i32 = arith.constant 0 : i32
    return %arg0, %arg1 : i32, i32
  }
}

</mosaic_0001>

<llo_original>
// kernel: tpu_custom_call.1
$region0: #{tpu_custom_call.1}
  #allocation0 [shape = 'u32[]', space=smem, size = 0x4, offset = 0x4, fixed_abs, tag = 'smem constant byte address 0x4 - core index']
  #allocation1 [shape = 'u32[144,128]{1,0:T(1,128)}', space=vmem, size = 0x12000, scoped, tag = 'internal scratch']
  #allocation2 [shape = 'f32[128,32]{1,0:T(8,128)}', space=vmem, size = 0x10000, scoped, tag = 'scratch operand']
  %s0 = inlined_call_operand.hbm [shape: bf16[128,16], index: 0, kind: input, shape index: {}]
  %s1 = inlined_call_operand.hbm [shape: bf16[16,32], index: 1, kind: input, shape index: {}]
  %s2 = inlined_call_operand.hbm [shape: f32[1,32], index: 2, kind: input, shape index: {}]
  %s3 = inlined_call_operand.hbm [shape: f32[128,32], index: 3, kind: output, shape index: {}]
  %s4 = sld [smem:[#allocation0]]
  $region42: #{tpu_custom_call.1} parent=0
    _
  %s6 = ssub.s32 1, %s4
  %s7 = scalar_select 0, %s6, %s4
  $region1: #{tpu_custom_call.1} parent=0
    #allocation3 [shape = 'u8[32768]{0}', space=vmem, size = 0x8000, scoped, tag = 'input window, operand 0, single buffered']
    #allocation4 [shape = 's32[1]{0}', space=sflag, size = 0x4, scoped, tag = 'scoped memory for tpu_custom_call.1']
    #allocation5 [shape = 's32[1]{0}', space=sflag, size = 0x4, scoped, tag = 'scoped memory for tpu_custom_call.1']
    #allocation6 [shape = 'u8[4096]{0}', space=vmem, size = 0x1000, scoped, tag = 'input window, operand 1, single buffered']
    #allocation7 [shape = 's32[1]{0}', space=sflag, size = 0x4, scoped, tag = 'scoped memory for tpu_custom_call.1']
    #allocation8 [shape = 'u8[512]{0}', space=vmem, size = 0x400, scoped, tag = 'input window, operand 2, single buffered']
    #allocation9 [shape = 'u8[65536]{0}', space=vmem, size = 0x10000, scoped, tag = 'output window, operand 0, single buffered']
    %8 = vsyncpa [#allocation4], 0
    %9 = vsyncpa [#allocation7], 0
    %10 = vsyncpa [#allocation5], 0
    // Predicated region
    $region2: #{tpu_custom_call.1} parent=1 // pred_check
      _
    $region3: #{tpu_custom_call.1} parent=1 // pred_check_branch
      %12 = sbr.rel (0) target = $region5
    $region4: #{tpu_custom_call.1} parent=1 // pred_region
      %s14 = ssub.s32 1024, 1024
      %15 = vsyncadd [#allocation4], %s14
      %s16 = sshll.u32 [#allocation3], 4
      %s17 = int_to_ptr.vmem [resolvable:$true] %s16
      %22 = dma.hbm_to_vmem [thread:$0]  %s0, 1024, %s17, [#allocation4], 64, 64, 4
    $region5: #{tpu_custom_call.1} parent=1 // pred_fallthru
      _
    // Predicated region
    $region6: #{tpu_custom_call.1} parent=1 // pred_check
      _
    $region7: #{tpu_custom_call.1} parent=1 // pred_check_branch
      %24 = sbr.rel (0) target = $region9
    $region8: #{tpu_custom_call.1} parent=1 // pred_region
      %s26 = ssub.s32 128, 128
      %27 = vsyncadd [#allocation7], %s26
      %s28 = sshll.u32 [#allocation6], 4
      %s29 = int_to_ptr.vmem [resolvable:$true] %s28
      %34 = dma.hbm_to_vmem [thread:$0]  %s1, 128, %s29, [#allocation7], 64, 64, 4
    $region9: #{tpu_custom_call.1} parent=1 // pred_fallthru
      _
    // Predicated region
    $region10: #{tpu_custom_call.1} parent=1 // pred_check
      _
    $region11: #{tpu_custom_call.1} parent=1 // pred_check_branch
      %36 = sbr.rel (0) target = $region13
    $region12: #{tpu_custom_call.1} parent=1 // pred_region
      %s38 = ssub.s32 16, 16
      %39 = vsyncadd [#allocation7], %s38
      %s41 = sshll.u32 [#allocation8], 4
      %s42 = int_to_ptr.vmem [resolvable:$true] %s41
      %44 = dma.hbm_to_vmem [thread:$0]  %s2, 16, %s42, [#allocation7]
    $region13: #{tpu_custom_call.1} parent=1 // pred_fallthru
      _
    // Predicated region
    $region14: #{tpu_custom_call.1} parent=1 // pred_check
      _
    $region15: #{tpu_custom_call.1} parent=1 // pred_check_branch
      %46 = sbr.rel (0) target = $region17
    $region16: #{tpu_custom_call.1} parent=1 // pred_region
      %47 = dma.done [#allocation4], 1024
    $region17: #{tpu_custom_call.1} parent=1 // pred_fallthru
      _
    // Predicated region
    $region18: #{tpu_custom_call.1} parent=1 // pred_check
      _
    $region19: #{tpu_custom_call.1} parent=1 // pred_check_branch
      %49 = sbr.rel (0) target = $region21
    $region20: #{tpu_custom_call.1} parent=1 // pred_region
      %50 = dma.done [#allocation7], 128
    $region21: #{tpu_custom_call.1} parent=1 // pred_fallthru
      _
    // Predicated region
    $region22: #{tpu_custom_call.1} parent=1 // pred_check
      _
    $region23: #{tpu_custom_call.1} parent=1 // pred_check_branch
      %52 = sbr.rel (0) target = $region25
    $region24: #{tpu_custom_call.1} parent=1 // pred_region
      %53 = dma.done [#allocation7], 16
    $region25: #{tpu_custom_call.1} parent=1 // pred_fallthru
      _
    %p55 = scmp.eq.s32.totalorder 0, 0
    // Predicated region
    $region26: #{tpu_custom_call.1} parent=1 // pred_check
      %p56 = pneg %p55
    $region27: #{tpu_custom_call.1} parent=1 // pred_check_branch
      %58 = sbr.rel (%p56) target = $region29
    $region28: #{tpu_custom_call.1} parent=1 // pred_region
      %vm59 = vcmask 261120
      %60 = vst.msk [vmem:[#allocation2] sm:$0xff] %vm59, 0.0
      %61 = vst.msk [vmem:[#allocation2 + $0x8] sm:$0xff] %vm59, 0.0
      %62 = vst.msk [vmem:[#allocation2 + $0x10] sm:$0xff] %vm59, 0.0
      %63 = vst.msk [vmem:[#allocation2 + $0x18] sm:$0xff] %vm59, 0.0
      %64 = vst.msk [vmem:[#allocation2 + $0x20] sm:$0xff] %vm59, 0.0
      %65 = vst.msk [vmem:[#allocation2 + $0x28] sm:$0xff] %vm59, 0.0
      %66 = vst.msk [vmem:[#allocation2 + $0x30] sm:$0xff] %vm59, 0.0
      %67 = vst.msk [vmem:[#allocation2 + $0x38] sm:$0xff] %vm59, 0.0
      %68 = vst.msk [vmem:[#allocation2 + $0x40] sm:$0xff] %vm59, 0.0
      %69 = vst.msk [vmem:[#allocation2 + $0x48] sm:$0xff] %vm59, 0.0
      %70 = vst.msk [vmem:[#allocation2 + $0x50] sm:$0xff] %vm59, 0.0
      %71 = vst.msk [vmem:[#allocation2 + $0x58] sm:$0xff] %vm59, 0.0
      %72 = vst.msk [vmem:[#allocation2 + $0x60] sm:$0xff] %vm59, 0.0
      %73 = vst.msk [vmem:[#allocation2 + $0x68] sm:$0xff] %vm59, 0.0
      %74 = vst.msk [vmem:[#allocation2 + $0x70] sm:$0xff] %vm59, 0.0
      %75 = vst.msk [vmem:[#allocation2 + $0x78] sm:$0xff] %vm59, 0.0
    $region29: #{tpu_custom_call.1} parent=1 // pred_fallthru
      _
    %v76 = vld [vmem:[#allocation2] sm:$0xff]
    %v77 = vld [vmem:[#allocation2 + $0x8] sm:$0xff]
    %v78 = vld [vmem:[#allocation2 + $0x10] sm:$0xff]
    %v79 = vld [vmem:[#allocation2 + $0x18] sm:$0xff]
    %v80 = vld [vmem:[#allocation2 + $0x20] sm:$0xff]
    %v81 = vld [vmem:[#allocation2 + $0x28] sm:$0xff]
    %v82 = vld [vmem:[#allocation2 + $0x30] sm:$0xff]
    %v83 = vld [vmem:[#allocation2 + $0x38] sm:$0xff]
    %v84 = vld [vmem:[#allocation2 + $0x40] sm:$0xff]
    %v85 = vld [vmem:[#allocation2 + $0x48] sm:$0xff]
    %v86 = vld [vmem:[#allocation2 + $0x50] sm:$0xff]
    %v87 = vld [vmem:[#allocation2 + $0x58] sm:$0xff]
    %v88 = vld [vmem:[#allocation2 + $0x60] sm:$0xff]
    %v89 = vld [vmem:[#allocation2 + $0x68] sm:$0xff]
    %v90 = vld [vmem:[#allocation2 + $0x70] sm:$0xff]
    %v91 = vld [vmem:[#allocation2 + $0x78] sm:$0xff]
    %v92 = vld [vmem:[#allocation3] sm:$0xf]
    %v93 = vld [vmem:[#allocation3 + $0x4] sm:$0xf]
    %v94 = vld [vmem:[#allocation3 + $0x8] sm:$0xf]
    %v95 = vld [vmem:[#allocation3 + $0xc] sm:$0xf]
    %v96 = vld [vmem:[#allocation3 + $0x10] sm:$0xf]
    %v97 = vld [vmem:[#allocation3 + $0x14] sm:$0xf]
    %v98 = vld [vmem:[#allocation3 + $0x18] sm:$0xf]
    %v99 = vld [vmem:[#allocation3 + $0x1c] sm:$0xf]
    %v100 = vld [vmem:[#allocation3 + $0x20] sm:$0xf]
    %v101 = vld [vmem:[#allocation3 + $0x24] sm:$0xf]
    %v102 = vld [vmem:[#allocation3 + $0x28] sm:$0xf]
    %v103 = vld [vmem:[#allocation3 + $0x2c] sm:$0xf]
    %v104 = vld [vmem:[#allocation3 + $0x30] sm:$0xf]
    %v105 = vld [vmem:[#allocation3 + $0x34] sm:$0xf]
    %v106 = vld [vmem:[#allocation3 + $0x38] sm:$0xf]
    %v107 = vld [vmem:[#allocation3 + $0x3c] sm:$0xf]
    %v108 = vld [vmem:[#allocation6] sm:$0xf]
    %v109 = vld [vmem:[#allocation6 + $0x4] sm:$0xf]
    %v126 = vunpack.c.l.b16 %v92
    %v127 = vunpack.c.l.b16 %v93
    %v128 = vunpack.c.l.b16 %v94
    %v129 = vunpack.c.l.b16 %v95
    %v130 = vunpack.c.l.b16 %v96
    %v131 = vunpack.c.l.b16 %v97
    %v132 = vunpack.c.l.b16 %v98
    %v133 = vunpack.c.l.b16 %v99
    %v134 = vunpack.c.l.b16 %v100
    %v135 = vunpack.c.l.b16 %v101
    %v136 = vunpack.c.l.b16 %v102
    %v137 = vunpack.c.l.b16 %v103
    %v138 = vunpack.c.l.b16 %v104
    %v139 = vunpack.c.l.b16 %v105
    %v140 = vunpack.c.l.b16 %v106
    %v141 = vunpack.c.l.b16 %v107
    %v142 = vpack.c.b16 %v127, %v126
    %v143 = vpack.c.b16 %v129, %v128
    %v144 = vpack.c.b16 %v131, %v130
    %v145 = vpack.c.b16 %v133, %v132
    %v146 = vpack.c.b16 %v135, %v134
    %v147 = vpack.c.b16 %v137, %v136
    %v148 = vpack.c.b16 %v139, %v138
    %v149 = vpack.c.b16 %v141, %v140
    %v152 = vunpack.c.l.b16 %v108
    %v153 = vunpack.c.l.b16 %v109
    %v154 = vpack.c.b16 %v153, %v152
    %vm156 = vcmask 130048
    %v158 = vsel %vm156, %v142, 0
    %v161 = vsel %vm156, %v143, 0
    %v164 = vsel %vm156, %v144, 0
    %v167 = vsel %vm156, %v145, 0
    %v170 = vsel %vm156, %v146, 0
    %v173 = vsel %vm156, %v147, 0
    %v176 = vsel %vm156, %v148, 0
    %v179 = vsel %vm156, %v149, 0
    %181 = vmatprep.subr.bf16.mxu0 0
    %182 = vmatpush1.bf16.msra.mxu0 %v154
    %183 = vmatprep.subr.bf16.mxu0 0
    %184 = vmatpush1.bf16.msra.mxu0 0
    %185 = vmatprep.subr.bf16.mxu0 0
    %186 = vmatpush1.bf16.msra.mxu0 0
    %187 = vmatprep.subr.bf16.mxu0 0
    %188 = vmatpush1.bf16.msra.mxu0 0
    %189 = vmatprep.subr.bf16.mxu0 0
    %190 = vmatpush1.bf16.msra.mxu0 0
    %191 = vmatprep.subr.bf16.mxu0 0
    %192 = vmatpush1.bf16.msra.mxu0 0
    %193 = vmatprep.subr.bf16.mxu0 0
    %194 = vmatpush1.bf16.msra.mxu0 0
    %195 = vmatprep.subr.bf16.mxu0 0
    %196 = vmatpush1.bf16.msra.mxu0 0
    %197 = vmatprep.subr.bf16.mxu0 0
    %198 = vmatpush1.bf16.msra.mxu0 0
    %199 = vmatprep.subr.bf16.mxu0 0
    %200 = vmatpush1.bf16.msra.mxu0 0
    %201 = vmatprep.subr.bf16.mxu0 0
    %202 = vmatpush1.bf16.msra.mxu0 0
    %203 = vmatprep.subr.bf16.mxu0 0
    %204 = vmatpush1.bf16.msra.mxu0 0
    %205 = vmatprep.subr.bf16.mxu0 0
    %206 = vmatpush1.bf16.msra.mxu0 0
    %207 = vmatprep.subr.bf16.mxu0 0
    %208 = vmatpush1.bf16.msra.mxu0 0
    %209 = vmatprep.subr.bf16.mxu0 0
    %210 = vmatpush1.bf16.msra.mxu0 0
    %211 = vmatprep.subr.bf16.mxu0 0
    %212 = vmatpush1.bf16.msra.mxu0 0
    %213 = vmatprep.mubr.bf16.mxu0 0
    %214 = vmatmul.mubr.bf16.gmra.mrb[0].mxu0 %v158
    %v215 = vpop.f32.mrb[0].mxu0
    %v216 = vadd.f32 0.0, %v215
    %v217 = vpop.f32.mrb[0].mxu0
    %v218 = vpop.f32.mrb[0].mxu0
    %v219 = vadd.f32 0.0, %v218
    %v220 = vpop.f32.mrb[0].mxu0
    %221 = vmatprep.mubr.bf16.mxu0 0
    %222 = vmatmul.mubr.bf16.gmra.mrb[0].mxu0 %v161
    %v223 = vpop.f32.mrb[0].mxu0
    %v224 = vadd.f32 0.0, %v223
    %v225 = vpop.f32.mrb[0].mxu0
    %v226 = vpop.f32.mrb[0].mxu0
    %v227 = vadd.f32 0.0, %v226
    %v228 = vpop.f32.mrb[0].mxu0
    %229 = vmatprep.mubr.bf16.mxu0 0
    %230 = vmatmul.mubr.bf16.gmra.mrb[0].mxu0 %v164
    %v231 = vpop.f32.mrb[0].mxu0
    %v232 = vadd.f32 0.0, %v231
    %v233 = vpop.f32.mrb[0].mxu0
    %v234 = vpop.f32.mrb[0].mxu0
    %v235 = vadd.f32 0.0, %v234
    %v236 = vpop.f32.mrb[0].mxu0
    %237 = vmatprep.mubr.bf16.mxu0 0
    %238 = vmatmul.mubr.bf16.gmra.mrb[0].mxu0 %v167
    %v239 = vpop.f32.mrb[0].mxu0
    %v240 = vadd.f32 0.0, %v239
    %v241 = vpop.f32.mrb[0].mxu0
    %v242 = vpop.f32.mrb[0].mxu0
    %v243 = vadd.f32 0.0, %v242
    %v244 = vpop.f32.mrb[0].mxu0
    %245 = vmatprep.mubr.bf16.mxu0 0
    %246 = vmatmul.mubr.bf16.gmra.mrb[0].mxu0 %v170
    %v247 = vpop.f32.mrb[0].mxu0
    %v248 = vadd.f32 0.0, %v247
    %v249 = vpop.f32.mrb[0].mxu0
    %v250 = vpop.f32.mrb[0].mxu0
    %v251 = vadd.f32 0.0, %v250
    %v252 = vpop.f32.mrb[0].mxu0
    %253 = vmatprep.mubr.bf16.mxu0 0
    %254 = vmatmul.mubr.bf16.gmra.mrb[0].mxu0 %v173
    %v255 = vpop.f32.mrb[0].mxu0
    %v256 = vadd.f32 0.0, %v255
    %v257 = vpop.f32.mrb[0].mxu0
    %v258 = vpop.f32.mrb[0].mxu0
    %v259 = vadd.f32 0.0, %v258
    %v260 = vpop.f32.mrb[0].mxu0
    %261 = vmatprep.mubr.bf16.mxu0 0
    %262 = vmatmul.mubr.bf16.gmra.mrb[0].mxu0 %v176
    %v263 = vpop.f32.mrb[0].mxu0
    %v264 = vadd.f32 0.0, %v263
    %v265 = vpop.f32.mrb[0].mxu0
    %v266 = vpop.f32.mrb[0].mxu0
    %v267 = vadd.f32 0.0, %v266
    %v268 = vpop.f32.mrb[0].mxu0
    %269 = vmatprep.mubr.bf16.mxu0 0
    %270 = vmatmul.mubr.bf16.gmra.mrb[0].mxu0 %v179
    %v271 = vpop.f32.mrb[0].mxu0
    %v272 = vadd.f32 0.0, %v271
    %v273 = vpop.f32.mrb[0].mxu0
    %v274 = vpop.f32.mrb[0].mxu0
    %v275 = vadd.f32 0.0, %v274
    %v276 = vpop.f32.mrb[0].mxu0
    %277 = vdwg.mxu0
    %v278 = vadd.f32 %v76, %v216
    %v279 = vadd.f32 %v77, %v219
    %v280 = vadd.f32 %v78, %v224
    %v281 = vadd.f32 %v79, %v227
    %v282 = vadd.f32 %v80, %v232
    %v283 = vadd.f32 %v81, %v235
    %v284 = vadd.f32 %v82, %v240
    %v285 = vadd.f32 %v83, %v243
    %v286 = vadd.f32 %v84, %v248
    %v287 = vadd.f32 %v85, %v251
    %v288 = vadd.f32 %v86, %v256
    %v289 = vadd.f32 %v87, %v259
    %v290 = vadd.f32 %v88, %v264
    %v291 = vadd.f32 %v89, %v267
    %v292 = vadd.f32 %v90, %v272
    %v293 = vadd.f32 %v91, %v275
    %vm294 = vcmask 261120
    %295 = vst.msk [vmem:[#allocation2] sm:$0xff] %vm294, %v278
    %296 = vst.msk [vmem:[#allocation2 + $0x8] sm:$0xff] %vm294, %v279
    %297 = vst.msk [vmem:[#allocation2 + $0x10] sm:$0xff] %vm294, %v280
    %298 = vst.msk [vmem:[#allocation2 + $0x18] sm:$0xff] %vm294, %v281
    %299 = vst.msk [vmem:[#allocation2 + $0x20] sm:$0xff] %vm294, %v282
    %300 = vst.msk [vmem:[#allocation2 + $0x28] sm:$0xff] %vm294, %v283
    %301 = vst.msk [vmem:[#allocation2 + $0x30] sm:$0xff] %vm294, %v284
    %302 = vst.msk [vmem:[#allocation2 + $0x38] sm:$0xff] %vm294, %v285
    %303 = vst.msk [vmem:[#allocation2 + $0x40] sm:$0xff] %vm294, %v286
    %304 = vst.msk [vmem:[#allocation2 + $0x48] sm:$0xff] %vm294, %v287
    %305 = vst.msk [vmem:[#allocation2 + $0x50] sm:$0xff] %vm294, %v288
    %306 = vst.msk [vmem:[#allocation2 + $0x58] sm:$0xff] %vm294, %v289
    %307 = vst.msk [vmem:[#allocation2 + $0x60] sm:$0xff] %vm294, %v290
    %308 = vst.msk [vmem:[#allocation2 + $0x68] sm:$0xff] %vm294, %v291
    %309 = vst.msk [vmem:[#allocation2 + $0x70] sm:$0xff] %vm294, %v292
    %310 = vst.msk [vmem:[#allocation2 + $0x78] sm:$0xff] %vm294, %v293
    // Predicated region
    $region30: #{tpu_custom_call.1} parent=1 // pred_check
      %p311 = pneg %p55
    $region31: #{tpu_custom_call.1} parent=1 // pred_check_branch
      %313 = sbr.rel (%p311) target = $region33
    $region32: #{tpu_custom_call.1} parent=1 // pred_region
      %v314 = vld [vmem:[#allocation2] sm:$0xff]
      %v315 = vld [vmem:[#allocation2 + $0x8] sm:$0xff]
      %v316 = vld [vmem:[#allocation2 + $0x10] sm:$0xff]
      %v317 = vld [vmem:[#allocation2 + $0x18] sm:$0xff]
      %v318 = vld [vmem:[#allocation2 + $0x20] sm:$0xff]
      %v319 = vld [vmem:[#allocation2 + $0x28] sm:$0xff]
      %v320 = vld [vmem:[#allocation2 + $0x30] sm:$0xff]
      %v321 = vld [vmem:[#allocation2 + $0x38] sm:$0xff]
      %v322 = vld [vmem:[#allocation2 + $0x40] sm:$0xff]
      %v323 = vld [vmem:[#allocation2 + $0x48] sm:$0xff]
      %v324 = vld [vmem:[#allocation2 + $0x50] sm:$0xff]
      %v325 = vld [vmem:[#allocation2 + $0x58] sm:$0xff]
      %v326 = vld [vmem:[#allocation2 + $0x60] sm:$0xff]
      %v327 = vld [vmem:[#allocation2 + $0x68] sm:$0xff]
      %v328 = vld [vmem:[#allocation2 + $0x70] sm:$0xff]
      %v329 = vld [vmem:[#allocation2 + $0x78] sm:$0xff]
      %v330 = vld [vmem:[#allocation8] sm:$0x1]
      %v332 = vlaneseq
      %v333 = vshrl.u32 %v332, 7
      %v334 = vsub.s32 0, %v333
      %v335 = vrot.slane %v330, %v334
      %v337 = vadd.f32 %v314, %v335
      %v338 = vadd.f32 %v315, %v335
      %v339 = vadd.f32 %v316, %v335
      %v340 = vadd.f32 %v317, %v335
      %v341 = vadd.f32 %v318, %v335
      %v342 = vadd.f32 %v319, %v335
      %v343 = vadd.f32 %v320, %v335
      %v344 = vadd.f32 %v321, %v335
      %v345 = vadd.f32 %v322, %v335
      %v346 = vadd.f32 %v323, %v335
      %v347 = vadd.f32 %v324, %v335
      %v348 = vadd.f32 %v325, %v335
      %v349 = vadd.f32 %v326, %v335
      %v350 = vadd.f32 %v327, %v335
      %v351 = vadd.f32 %v328, %v335
      %v352 = vadd.f32 %v329, %v335
      %353 = vst.msk [vmem:[#allocation9] sm:$0xff] %vm294, %v337
      %354 = vst.msk [vmem:[#allocation9 + $0x8] sm:$0xff] %vm294, %v338
      %355 = vst.msk [vmem:[#allocation9 + $0x10] sm:$0xff] %vm294, %v339
      %356 = vst.msk [vmem:[#allocation9 + $0x18] sm:$0xff] %vm294, %v340
      %357 = vst.msk [vmem:[#allocation9 + $0x20] sm:$0xff] %vm294, %v341
      %358 = vst.msk [vmem:[#allocation9 + $0x28] sm:$0xff] %vm294, %v342
      %359 = vst.msk [vmem:[#allocation9 + $0x30] sm:$0xff] %vm294, %v343
      %360 = vst.msk [vmem:[#allocation9 + $0x38] sm:$0xff] %vm294, %v344
      %361 = vst.msk [vmem:[#allocation9 + $0x40] sm:$0xff] %vm294, %v345
      %362 = vst.msk [vmem:[#allocation9 + $0x48] sm:$0xff] %vm294, %v346
      %363 = vst.msk [vmem:[#allocation9 + $0x50] sm:$0xff] %vm294, %v347
      %364 = vst.msk [vmem:[#allocation9 + $0x58] sm:$0xff] %vm294, %v348
      %365 = vst.msk [vmem:[#allocation9 + $0x60] sm:$0xff] %vm294, %v349
      %366 = vst.msk [vmem:[#allocation9 + $0x68] sm:$0xff] %vm294, %v350
      %367 = vst.msk [vmem:[#allocation9 + $0x70] sm:$0xff] %vm294, %v351
      %368 = vst.msk [vmem:[#allocation9 + $0x78] sm:$0xff] %vm294, %v352
    $region33: #{tpu_custom_call.1} parent=1 // pred_fallthru
      _
    // Predicated region
    $region34: #{tpu_custom_call.1} parent=1 // pred_check
      _
    $region35: #{tpu_custom_call.1} parent=1 // pred_check_branch
      %370 = sbr.rel (0) target = $region37
    $region36: #{tpu_custom_call.1} parent=1 // pred_region
      %s372 = ssub.s32 2048, 2048
      %373 = vsyncadd [#allocation5], %s372
      %s374 = sshll.u32 [#allocation9], 4
      %s375 = int_to_ptr.vmem [resolvable:$true] %s374
      %380 = dma.vmem_to_hbm [thread:$0]  %s375, 2048, %s3, [#allocation5], 128, 128, 8
    $region37: #{tpu_custom_call.1} parent=1 // pred_fallthru
      _
    // Predicated region
    $region38: #{tpu_custom_call.1} parent=1 // pred_check
      _
    $region39: #{tpu_custom_call.1} parent=1 // pred_check_branch
      %382 = sbr.rel (0) target = $region41
    $region40: #{tpu_custom_call.1} parent=1 // pred_region
      %383 = dma.done [#allocation5], 2048
    $region41: #{tpu_custom_call.1} parent=1 // pred_fallthru
      _
    %384 = vsyncpa [#allocation4], 1
    %385 = vsyncpa [#allocation7], 1
    %386 = vsyncpa [#allocation5], 1

</llo_original>
